<compile_context>
chip_gen: v7x
topology: tpu7x:2x2x1
jax: 0.10.0
libtpu: 0.0.40
codegen_flags: <defaults>
</compile_context>

<pallas_src>
import jax
import jax.numpy as jnp
from jax.experimental import pallas as pl
from jax.experimental.pallas import tpu as pltpu


def _scalar_mul_kernel(scalar_ref, x_ref, o_ref):
    # scalar_ref: (1,) in SMEM (compute dtype); x_ref/o_ref: (br, cols) in VMEM.
    s = scalar_ref[0]
    o_ref[...] = (x_ref[...].astype(scalar_ref.dtype) * s).astype(o_ref.dtype)


# Per-operand block size target. 2 operands x 2x double-buffering = ~8 MiB,
# safely under every generation's scoped-VMEM default (v5e 16 MiB is the floor).
_TARGET_BLOCK_BYTES = 2 * 1024 * 1024
_COL_CANDIDATES = (4096, 2048, 1024, 512, 256, 128)


def _choose_layout(total, in_itemsize, out_itemsize):
    # Sublane multiple: 8 (4-byte), 16 (2-byte), 32 (1-byte); use the stricter
    # of input/output dtypes.
    sub = max(32 // min(in_itemsize, out_itemsize), 8)

    cols = None
    for c in _COL_CANDIDATES:
        if total % c == 0:
            cols = c
            break
    if cols is None:
        # Ragged element count: single pad of the flat vector to 128 lanes.
        cols = 128
        rows = -(-total // cols)
        needs_pad = True
    else:
        rows = total // cols
        needs_pad = False

    if rows <= sub:
        # Block covers the full row extent (allowed: block == full array dims).
        br = rows
    else:
        bytes_per_row = cols * max(in_itemsize, out_itemsize)
        br = max(sub, (_TARGET_BLOCK_BYTES // bytes_per_row) // sub * sub)
        br = min(br, (rows // sub) * sub)
    return cols, rows, br, needs_pad


@jax.jit
def scalar_multiply(x, scalar):
    """out = scalar * x (elementwise), via a Pallas TPU kernel."""
    orig_shape = x.shape
    out_dtype = jnp.result_type(x, scalar)  # match `scalar * x` promotion

    # Multiply in f32 for low-precision floats; otherwise in the output dtype.
    if jnp.dtype(out_dtype) in (jnp.dtype(jnp.bfloat16),
                                jnp.dtype(jnp.float16),
                                jnp.dtype(jnp.float32)):
        compute_dtype = jnp.float32
    else:
        compute_dtype = out_dtype

    total = 1
    for d in orig_shape:
        total *= d
    if total == 0:
        return jnp.zeros(orig_shape, out_dtype)

    in_itemsize = jnp.dtype(x.dtype).itemsize
    out_itemsize = jnp.dtype(out_dtype).itemsize
    cols, rows, br, needs_pad = _choose_layout(total, in_itemsize, out_itemsize)

    xf = x.reshape(-1)
    if needs_pad:
        # TODO(synk): handle the ragged tail with an in-kernel masked store
        # instead of this extra pad copy (rare fallback path).
        xf = jnp.pad(xf, (0, rows * cols - total))
    x2 = xf.reshape(rows, cols)

    scalar_arr = jnp.full((1,), scalar, dtype=compute_dtype)

    grid = (pl.cdiv(rows, br),)
    out2 = pl.pallas_call(
        _scalar_mul_kernel,
        out_shape=jax.ShapeDtypeStruct((rows, cols), out_dtype),
        grid_spec=pltpu.PrefetchScalarGridSpec(
            num_scalar_prefetch=0,
            grid=grid,
            in_specs=[
                pl.BlockSpec(memory_space=pltpu.SMEM),       # scalar, untiled
                pl.BlockSpec((br, cols), lambda i: (i, 0)),  # x tile
            ],
            out_specs=pl.BlockSpec((br, cols), lambda i: (i, 0)),
        ),
        compiler_params=pltpu.CompilerParams(
            dimension_semantics=("parallel",),  # lets v7x shard blocks over 2 TCs
        ),
    )(scalar_arr, x2)

    if needs_pad:
        return out2.reshape(-1)[:total].reshape(orig_shape)
    return out2.reshape(orig_shape)


if __name__ == "__main__":
    key = jax.random.PRNGKey(0)

    # Small NCHW feature map, matching the PyTorch module's typical input.
    x = jax.random.normal(key, (2, 4, 16, 16), dtype=jnp.float32)

    # Module default: ScalarMultiplyLayer(scalar=1).
    out = scalar_multiply(x, 1)
    jax.block_until_ready(out)
    assert out.shape == x.shape and out.dtype == x.dtype
    assert jnp.allclose(out, 1 * x, atol=0.0, rtol=0.0)

    # Non-trivial scalar (exercise the multiply path; exact in f32).
    out2 = scalar_multiply(x, 2.5)
    jax.block_until_ready(out2)
    assert jnp.allclose(out2, 2.5 * x, atol=0.0, rtol=0.0)

    # Larger array that exercises the multi-block (tiled) path.
    xb = jax.random.normal(jax.random.PRNGKey(1), (8, 8, 128, 128), dtype=jnp.float32)
    outb = scalar_multiply(xb, 0.125)
    jax.block_until_ready(outb)
    assert jnp.allclose(outb, 0.125 * xb, atol=0.0, rtol=0.0)

    # Ragged element count -> fallback padded path.
    xr = jax.random.normal(jax.random.PRNGKey(2), (3, 5, 7), dtype=jnp.float32)
    outr = scalar_multiply(xr, -3.0)
    jax.block_until_ready(outr)
    assert outr.shape == xr.shape
    assert jnp.allclose(outr, -3.0 * xr, atol=0.0, rtol=0.0)

    print("KERNEL_OK")
</pallas_src>

<mosaic_0001>
module attributes {stable_mosaic.version = 11 : i64} {
  func.func @_scalar_mul_kernel(%arg0: i32, %arg1: memref<1xf32, #tpu.memory_space<smem>>, %arg2: memref<1x2048xf32, #tpu.memory_space<vmem>>, %arg3: memref<1x2048xf32, #tpu.memory_space<vmem>>) attributes {dimension_semantics = [#tpu.dimension_semantics<parallel>], iteration_bounds = array<i64: 1>, scalar_prefetch = 0 : i64, scratch_operands = 0 : i64, tpu.core_type = #tpu.core_type<tc>, window_params = [{transform_indices = @transform_0, window_bounds = array<i64: 1>}, {transform_indices = @transform_1, window_bounds = array<i64: 1, 2048>}, {transform_indices = @transform_2, window_bounds = array<i64: 1, 2048>}]} {
    %c0 = arith.constant 0 : index
    %0 = memref.load %arg1[%c0] : memref<1xf32, #tpu.memory_space<smem>>
    %c0_0 = arith.constant 0 : index
    %c0_1 = arith.constant 0 : index
    %1 = vector.load %arg2[%c0_0, %c0_1] : memref<1x2048xf32, #tpu.memory_space<vmem>>, vector<1x2048xf32>
    %2 = vector.broadcast %0 : f32 to vector<1x2048xf32>
    %3 = arith.mulf %1, %2 : vector<1x2048xf32>
    %c0_2 = arith.constant 0 : index
    %c0_3 = arith.constant 0 : index
    %4 = vector.load %arg3[%c0_2, %c0_3] : memref<1x2048xf32, #tpu.memory_space<vmem>>, vector<1x2048xf32>
    tpu.vector_store %arg3[%c0_2, %c0_3], %3 {strides = array<i32>} : memref<1x2048xf32, #tpu.memory_space<vmem>>, vector<1x2048xf32>,
    return
  }
  func.func @transform_0(%arg0: i32) -> i32 {
    %c0_i32 = arith.constant 0 : i32
    %c0_i32_0 = arith.constant 0 : i32
    return %c0_i32 : i32
  }
  func.func @transform_1(%arg0: i32) -> (i32, i32) {
    %c0_i32 = arith.constant 0 : i32
    %c0_i32_0 = arith.constant 0 : i32
    return %arg0, %c0_i32 : i32, i32
  }
  func.func @transform_2(%arg0: i32) -> (i32, i32) {
    %c0_i32 = arith.constant 0 : i32
    %c0_i32_0 = arith.constant 0 : i32
    return %arg0, %c0_i32 : i32, i32
  }
}

</mosaic_0001>

<llo_original>
// kernel: scalar_multiply.1
$region0: #{scalar_multiply.1}
  #allocation0 [shape = 'u32[]', space=smem, size = 0x4, offset = 0x4, fixed_abs, tag = 'smem constant byte address 0x4 - core index']
  #allocation1 [shape = 'u32[144,128]{1,0:T(1,128)}', space=vmem, size = 0x12000, scoped, tag = 'internal scratch']
  #allocation2 [shape = 'f32[1]{0:T(128)S(6)}', space=smem, size = 0x200, scoped, tag = 'scoped memory for scalar_multiply.1']
  %s0 = inlined_call_operand.<no memory space> [shape: f32[1], index: 0, kind: input, shape index: {}]
  %s1 = inlined_call_operand.vmem [shape: f32[1,2048], index: 1, kind: input, shape index: {}]
  %s2 = inlined_call_operand.vmem [shape: f32[1,2048], index: 2, kind: output, shape index: {}]
  %s3 = sld [smem:[#allocation0]]
  $region18: #{scalar_multiply.1} parent=0
    _
  %s5 = ssub.s32 1, %s3
  %s6 = scalar_select 0, %s5, %s3
  %7 = sst [smem:[#allocation2]] %s0
  // Predicated region
  $region2: #{scalar_multiply.1} parent=0 // pred_check
    _
  $region3: #{scalar_multiply.1} parent=0 // pred_check_branch
    %9 = sbr.rel (0) target = $region5
  $region4: #{scalar_multiply.1} parent=0 // pred_region
    _
  $region5: #{scalar_multiply.1} parent=0 // pred_fallthru
    _
  // Predicated region
  $region6: #{scalar_multiply.1} parent=0 // pred_check
    _
  $region7: #{scalar_multiply.1} parent=0 // pred_check_branch
    %11 = sbr.rel (0) target = $region9
  $region8: #{scalar_multiply.1} parent=0 // pred_region
    _
  $region9: #{scalar_multiply.1} parent=0 // pred_fallthru
    _
  %s12 = sld [smem:[#allocation2]]
  %v13 = vld [vmem:[%s1] sm:$0xff]
  %v14 = vld [vmem:[%s1 + $0x8] sm:$0xff]
  %v15 = vstv %s12
  %v16 = vmul.f32 %v13, %v15
  %v17 = vmul.f32 %v14, %v15
  %18 = vst [vmem:[%s2] sm:$0xff] %v16
  %19 = vst [vmem:[%s2 + $0x8] sm:$0xff] %v17
  // Predicated region
  $region10: #{scalar_multiply.1} parent=0 // pred_check
    _
  $region11: #{scalar_multiply.1} parent=0 // pred_check_branch
    %21 = sbr.rel (0) target = $region13
  $region12: #{scalar_multiply.1} parent=0 // pred_region
    _
  $region13: #{scalar_multiply.1} parent=0 // pred_fallthru
    _
  // Predicated region
  $region14: #{scalar_multiply.1} parent=0 // pred_check
    _
  $region15: #{scalar_multiply.1} parent=0 // pred_check_branch
    %23 = sbr.rel (0) target = $region17
  $region16: #{scalar_multiply.1} parent=0 // pred_region
    _
  $region17: #{scalar_multiply.1} parent=0 // pred_fallthru
    _

</llo_original>
